<compile_context>
chip_gen: v7x
topology: tpu7x:2x2x1
jax: 0.10.0
libtpu: 0.0.40
codegen_flags: <defaults>
</compile_context>

<pallas_src>
import functools

import jax
import jax.numpy as jnp
from jax import lax
from jax.experimental import pallas as pl
from jax.experimental.pallas import tpu as pltpu

_LANE = 128
_SUB = 8
_BLOCK_BYTES = 1 << 20          # ~1 MiB per input block: safe under v5e's 16 MiB scoped VMEM
_PER_SAMPLE_MIN_ROWS = 1024     # per-sample tiling only once per-sample tiles are >=512 KiB f32


def _round_up(v, m):
    return ((v + m - 1) // m) * m


# --------------------------------------------------------------------------------------
# Flat path: blocks span sample boundaries; |thr(beta)| applied per row via a (tm,1) vec.
# --------------------------------------------------------------------------------------
def _irw_l1_flat_kernel(x_ref, y_ref, brow_ref, o_ref, *, tm, t_per_part, n_rows,
                        spanned_rows):
    p = pl.program_id(0)   # parallel part (keeps both v7x cores busy)
    t = pl.program_id(1)   # reduction tiles within the part

    @pl.when(t == 0)
    def _():
        o_ref[...] = jnp.zeros_like(o_ref)

    # |b*x - b*y| == |b| * |x - y|; |thr(b)| was expanded per row in the wrapper.
    d = jnp.abs(x_ref[...].astype(jnp.float32) - y_ref[...].astype(jnp.float32))
    contrib = brow_ref[...] * d                                   # (tm,1) * (tm,128)

    if spanned_rows > n_rows:  # static: only compile the mask when tiles can overhang
        row0 = (p * t_per_part + t) * tm
        rid = lax.broadcasted_iota(jnp.int32, (tm, 1), 0)
        contrib = jnp.where(rid < (n_rows - row0), contrib, 0.0)

    # Row-group reduce into a vreg-shaped (8,128) accumulator: plain VPU adds, no
    # cross-lane work in the hot loop.  (Same pattern as the validated v1 kernel;
    # if a bundle dump ever shows a materialized (tm,128) temp, rewrite as an
    # unrolled fori_loop over 8-row groups.)
    o_ref[0] += contrib.reshape(tm // _SUB, _SUB, _LANE).sum(axis=0)


def _irw_l1_flat(x2, y2, b_abs, N, M, total):
    R = N * M
    beta_rows = jnp.repeat(b_abs, M).reshape(R, 1)   # tiny: N*M f32 values

    Rp = _round_up(R, _SUB)
    if Rp != R:
        # TODO(synk): rare corner (N*ceil(L/128) not a multiple of 8); avoid this
        # full-copy pad by allowing an oversized first block + masking instead.
        x2 = jnp.pad(x2, ((0, Rp - R), (0, 0)))
        y2 = jnp.pad(y2, ((0, Rp - R), (0, 0)))
        beta_rows = jnp.pad(beta_rows, ((0, Rp - R), (0, 0)))

    itemsize = max(jnp.dtype(x2.dtype).itemsize, jnp.dtype(y2.dtype).itemsize)
    target_rows = max(_SUB, (_BLOCK_BYTES // (_LANE * itemsize)) // _SUB * _SUB)
    tm = min(target_rows, Rp)
    n_blocks = pl.cdiv(Rp, tm)
    P = 2 if n_blocks >= 2 else 1          # second "parallel" axis for v7x megacore
    T = pl.cdiv(n_blocks, P)
    last_blk = n_blocks - 1

    def data_map(p, t):
        # Clamp duplicated trailing tiles to the last real block (their rows are
        # masked in-kernel); identical consecutive block indices also elide DMA.
        return (jnp.minimum(p * T + t, last_blk), 0)

    kernel = functools.partial(
        _irw_l1_flat_kernel, tm=tm, t_per_part=T, n_rows=R, spanned_rows=P * T * tm)

    partials = pl.pallas_call(
        kernel,
        out_shape=jax.ShapeDtypeStruct((P, _SUB, _LANE), jnp.float32),
        grid_spec=pltpu.PrefetchScalarGridSpec(
            num_scalar_prefetch=0,
            grid=(P, T),
            in_specs=[
                pl.BlockSpec((tm, _LANE), data_map),
                pl.BlockSpec((tm, _LANE), data_map),
                pl.BlockSpec((tm, 1), data_map),
            ],
            out_specs=pl.BlockSpec((1, _SUB, _LANE), lambda p, t: (p, 0, 0)),
        ),
        compiler_params=pltpu.CompilerParams(
            dimension_semantics=("parallel", "arbitrary"),
        ),
        cost_estimate=pl.CostEstimate(
            flops=5 * Rp * _LANE,
            transcendentals=0,
            bytes_accessed=Rp * _LANE * (jnp.dtype(x2.dtype).itemsize
                                         + jnp.dtype(y2.dtype).itemsize)
            + Rp * 4 + P * _SUB * _LANE * 4,
        ),
    )(x2, y2, beta_rows)

    return jnp.sum(partials) / jnp.float32(total)


# --------------------------------------------------------------------------------------
# Per-sample path: grid (N, tiles); beta-gated index_map skips HBM traffic for
# thresholded-out samples; |beta| applied once per sample on the (8,128) partial.
# --------------------------------------------------------------------------------------
def _irw_l1_per_sample_kernel(active_sm, babs_sm, x_ref, y_ref, o_ref, *, tm, n_rows):
    i = pl.program_id(0)   # sample (parallel)
    t = pl.program_id(1)   # reduction tile within the sample (arbitrary)

    @pl.when(t == 0)
    def _():
        o_ref[...] = jnp.zeros_like(o_ref)

    @pl.when(active_sm[i] > 0)
    def _():
        d = jnp.abs(x_ref[0].astype(jnp.float32) - y_ref[0].astype(jnp.float32))
        if n_rows % tm:  # static: mask only compiled when the last tile overhangs
            row0 = t * tm
            rid = lax.broadcasted_iota(jnp.int32, (tm, 1), 0)
            d = jnp.where(rid < (n_rows - row0), d, 0.0)
        o_ref[0] += d.reshape(tm // _SUB, _SUB, _LANE).sum(axis=0)

    @pl.when(t == pl.num_programs(1) - 1)
    def _():
        # |b*x - b*y| == |b| * |x - y|; apply |thr(b)| once per sample.
        o_ref[...] = o_ref[...] * babs_sm[i]


def _irw_l1_per_sample(x2, y2, b_abs, N, M, total):
    x3 = x2.reshape(N, M, _LANE)
    y3 = y2.reshape(N, M, _LANE)
    active = (b_abs > 0.0).astype(jnp.int32)

    itemsize = max(jnp.dtype(x3.dtype).itemsize, jnp.dtype(y3.dtype).itemsize)
    target_rows = max(_SUB, (_BLOCK_BYTES // (_LANE * itemsize)) // _SUB * _SUB)
    tm = min(target_rows, (M // _SUB) * _SUB)
    T = pl.cdiv(M, tm)

    def data_map(i, t, active_sm, babs_sm):
        # Thresholded-out samples keep returning block 0: Pallas elides the DMA when
        # the block index repeats, so an inactive sample fetches at most one tile.
        return (i, jnp.where(active_sm[i] > 0, t, 0), 0)

    kernel = functools.partial(_irw_l1_per_sample_kernel, tm=tm, n_rows=M)

    partials = pl.pallas_call(
        kernel,
        out_shape=jax.ShapeDtypeStruct((N, _SUB, _LANE), jnp.float32),
        grid_spec=pltpu.PrefetchScalarGridSpec(
            num_scalar_prefetch=2,   # active mask (int32) + |thr(beta)| (f32) -> SMEM
            grid=(N, T),
            in_specs=[
                pl.BlockSpec((1, tm, _LANE), data_map),
                pl.BlockSpec((1, tm, _LANE), data_map),
            ],
            out_specs=pl.BlockSpec((1, _SUB, _LANE),
                                   lambda i, t, active_sm, babs_sm: (i, 0, 0)),
        ),
        compiler_params=pltpu.CompilerParams(
            dimension_semantics=("parallel", "arbitrary"),
        ),
        cost_estimate=pl.CostEstimate(
            flops=4 * N * M * _LANE,
            transcendentals=0,
            bytes_accessed=N * M * _LANE * (jnp.dtype(x3.dtype).itemsize
                                            + jnp.dtype(y3.dtype).itemsize)
            + N * 8 + N * _SUB * _LANE * 4,
        ),
    )(active, b_abs, x3, y3)

    return jnp.sum(partials) / jnp.float32(total)


# --------------------------------------------------------------------------------------
# Public wrapper
# --------------------------------------------------------------------------------------
def irw_l1_loss(x, y, beta, threshold):
    """x, y: (N, C, H, W) f32/bf16; beta: (N,). Returns scalar mean(|thr(beta)*(x - y)|)."""
    N, C, H, W = x.shape
    assert y.shape == x.shape
    assert beta.shape == (N,)

    L = C * H * W
    total = N * L
    M = pl.cdiv(L, _LANE)          # 128-lane rows per sample

    xf = x.reshape(N, L)
    yf = y.reshape(N, L)
    if L % _LANE:
        # TODO(synk): replace this full-copy lane pad with an in-kernel lane mask on the
        # last column group (only hit when C*H*W is not a multiple of 128).
        pad = M * _LANE - L
        xf = jnp.pad(xf, ((0, 0), (0, pad)))
        yf = jnp.pad(yf, ((0, 0), (0, pad)))
    x2 = xf.reshape(N * M, _LANE)  # free bitcast when no pad was needed
    y2 = yf.reshape(N * M, _LANE)

    bf = beta.astype(jnp.float32)
    b_abs = jnp.abs(jnp.where(bf > jnp.float32(threshold), bf, jnp.float32(0.0)))

    if M >= _PER_SAMPLE_MIN_ROWS:
        return _irw_l1_per_sample(x2, y2, b_abs, N, M, total)
    return _irw_l1_flat(x2, y2, b_abs, N, M, total)


if __name__ == "__main__":
    key = jax.random.PRNGKey(0)
    kx, ky, kb = jax.random.split(key, 3)
    threshold = 0.3

    def reference(x, y, beta):
        b = jnp.where(beta > threshold, beta, 0.0).reshape(-1, 1, 1, 1).astype(jnp.float32)
        return jnp.mean(jnp.abs(b * x.astype(jnp.float32) - b * y.astype(jnp.float32)))

    # Case 1: small per-sample size -> flat tiling path (blocks span samples).
    N, C, H, W = 2, 4, 16, 16
    x = jax.random.normal(kx, (N, C, H, W), dtype=jnp.float32)
    y = jax.random.normal(ky, (N, C, H, W), dtype=jnp.float32)
    beta = jax.random.uniform(kb, (N,), dtype=jnp.float32)
    loss = jax.block_until_ready(irw_l1_loss(x, y, beta, threshold))
    ref = reference(x, y, beta)
    assert jnp.allclose(loss, ref, rtol=1e-5, atol=1e-6), (loss, ref)

    # Case 2: large per-sample size -> per-sample path with multi-tile reduction,
    # tail-row masking (M % tm != 0) and one thresholded-out sample (DMA elision).
    N2, C2, H2, W2 = 2, 10, 256, 128
    x2 = jax.random.normal(kx, (N2, C2, H2, W2), dtype=jnp.float32)
    y2 = jax.random.normal(ky, (N2, C2, H2, W2), dtype=jnp.float32)
    beta2 = jnp.array([0.9, 0.1], dtype=jnp.float32)   # second sample below threshold
    loss2 = jax.block_until_ready(irw_l1_loss(x2, y2, beta2, threshold))
    ref2 = reference(x2, y2, beta2)
    assert jnp.allclose(loss2, ref2, rtol=1e-4, atol=1e-6), (loss2, ref2)

    # Case 3: bf16 inputs (cast to f32 in-kernel; halves HBM traffic).
    xb = x.astype(jnp.bfloat16)
    yb = y.astype(jnp.bfloat16)
    loss3 = jax.block_until_ready(irw_l1_loss(xb, yb, beta, threshold))
    ref3 = reference(xb, yb, beta)
    assert jnp.allclose(loss3, ref3, rtol=1e-4, atol=1e-6), (loss3, ref3)

    print("KERNEL_OK")
</pallas_src>

<mosaic_0001>
module attributes {stable_mosaic.version = 11 : i64} {
  func.func @_irw_l1_flat_kernel(%arg0: i32, %arg1: i32, %arg2: memref<16x128xf32, #tpu.memory_space<vmem>>, %arg3: memref<16x128xf32, #tpu.memory_space<vmem>>, %arg4: memref<16x1xf32, #tpu.memory_space<vmem>>, %arg5: memref<1x8x128xf32, #tpu.memory_space<vmem>>) attributes {dimension_semantics = [#tpu.dimension_semantics<parallel>, #tpu.dimension_semantics<arbitrary>], iteration_bounds = array<i64: 1, 1>, scalar_prefetch = 0 : i64, scratch_operands = 0 : i64, tpu.core_type = #tpu.core_type<tc>, window_params = [{transform_indices = @transform_0, window_bounds = array<i64: 16, 128>}, {transform_indices = @transform_1, window_bounds = array<i64: 16, 128>}, {transform_indices = @transform_2, window_bounds = array<i64: 16, 1>}, {transform_indices = @transform_3, window_bounds = array<i64: 1, 8, 128>}]} {
    %c0_i32 = arith.constant 0 : i32
    %0 = arith.cmpi eq, %arg1, %c0_i32 : i32
    %1 = arith.extui %0 : i1 to i32
    %c0_i32_0 = arith.constant 0 : i32
    %2 = arith.cmpi ne, %1, %c0_i32_0 : i32
    scf.if %2 {
      %cst_12 = arith.constant 0.000000e+00 : f32
      %18 = vector.broadcast %cst_12 : f32 to vector<1x8x128xf32>
      %c0_13 = arith.constant 0 : index
      %c0_14 = arith.constant 0 : index
      %c0_15 = arith.constant 0 : index
      %19 = vector.load %arg5[%c0_13, %c0_14, %c0_15] : memref<1x8x128xf32, #tpu.memory_space<vmem>>, vector<1x8x128xf32>
      tpu.vector_store %arg5[%c0_13, %c0_14, %c0_15], %18 {strides = array<i32>} : memref<1x8x128xf32, #tpu.memory_space<vmem>>, vector<1x8x128xf32>,
    } else {
    }
    %c0 = arith.constant 0 : index
    %c0_1 = arith.constant 0 : index
    %3 = vector.load %arg2[%c0, %c0_1] : memref<16x128xf32, #tpu.memory_space<vmem>>, vector<16x128xf32>
    %c0_2 = arith.constant 0 : index
    %c0_3 = arith.constant 0 : index
    %4 = vector.load %arg3[%c0_2, %c0_3] : memref<16x128xf32, #tpu.memory_space<vmem>>, vector<16x128xf32>
    %5 = arith.subf %3, %4 : vector<16x128xf32>
    %6 = math.absf %5 : vector<16x128xf32>
    %c0_4 = arith.constant 0 : index
    %c0_5 = arith.constant 0 : index
    %7 = vector.load %arg4[%c0_4, %c0_5] : memref<16x1xf32, #tpu.memory_space<vmem>>, vector<16x1xf32>
    %8 = vector.broadcast %7 : vector<16x1xf32> to vector<16x128xf32>
    %9 = arith.mulf %8, %6 : vector<16x128xf32>
    %c0_6 = arith.constant 0 : index
    %c0_7 = arith.constant 0 : index
    %c0_8 = arith.constant 0 : index
    %10 = vector.load %arg5[%c0_6, %c0_7, %c0_8] : memref<1x8x128xf32, #tpu.memory_space<vmem>>, vector<1x8x128xf32>
    %11 = vector.shape_cast %10 : vector<1x8x128xf32> to vector<8x128xf32>
    %12 = vector.shape_cast %9 : vector<16x128xf32> to vector<2x8x128xf32>
    %cst = arith.constant dense<0.000000e+00> : vector<8x128xf32>
    %13 = vector.multi_reduction <add>, %12, %cst [0] : vector<2x8x128xf32> to vector<8x128xf32>
    %14 = arith.addf %11, %13 : vector<8x128xf32>
    %c0_9 = arith.constant 0 : index
    %c0_10 = arith.constant 0 : index
    %c0_11 = arith.constant 0 : index
    %15 = vector.load %arg5[%c0_9, %c0_10, %c0_11] : memref<1x8x128xf32, #tpu.memory_space<vmem>>, vector<1x8x128xf32>
    %16 = vector.shape_cast %15 : vector<1x8x128xf32> to vector<8x128xf32>
    %17 = vector.shape_cast %14 : vector<8x128xf32> to vector<1x8x128xf32>
    tpu.vector_store %arg5[%c0_9, %c0_10, %c0_11], %17 {strides = array<i32>} : memref<1x8x128xf32, #tpu.memory_space<vmem>>, vector<1x8x128xf32>,
    return
  }
  func.func @transform_0(%arg0: i32, %arg1: i32) -> (i32, i32) {
    %c1_i32 = arith.constant 1 : i32
    %0 = arith.muli %arg0, %c1_i32 : i32
    %1 = arith.addi %0, %arg1 : i32
    %c0_i32 = arith.constant 0 : i32
    %2 = arith.minsi %1, %c0_i32 : i32
    %c0_i32_0 = arith.constant 0 : i32
    %c0_i32_1 = arith.constant 0 : i32
    return %2, %c0_i32_0 : i32, i32
  }
  func.func @transform_1(%arg0: i32, %arg1: i32) -> (i32, i32) {
    %c1_i32 = arith.constant 1 : i32
    %0 = arith.muli %arg0, %c1_i32 : i32
    %1 = arith.addi %0, %arg1 : i32
    %c0_i32 = arith.constant 0 : i32
    %2 = arith.minsi %1, %c0_i32 : i32
    %c0_i32_0 = arith.constant 0 : i32
    %c0_i32_1 = arith.constant 0 : i32
    return %2, %c0_i32_0 : i32, i32
  }
  func.func @transform_2(%arg0: i32, %arg1: i32) -> (i32, i32) {
    %c1_i32 = arith.constant 1 : i32
    %0 = arith.muli %arg0, %c1_i32 : i32
    %1 = arith.addi %0, %arg1 : i32
    %c0_i32 = arith.constant 0 : i32
    %2 = arith.minsi %1, %c0_i32 : i32
    %c0_i32_0 = arith.constant 0 : i32
    %c0_i32_1 = arith.constant 0 : i32
    return %2, %c0_i32_0 : i32, i32
  }
  func.func @transform_3(%arg0: i32, %arg1: i32) -> (i32, i32, i32) {
    %c0_i32 = arith.constant 0 : i32
    %c0_i32_0 = arith.constant 0 : i32
    %c0_i32_1 = arith.constant 0 : i32
    return %arg0, %c0_i32, %c0_i32_0 : i32, i32, i32
  }
}

</mosaic_0001>

<llo_original>
// kernel: tpu_custom_call.1
$region0: #{tpu_custom_call.1}
  #allocation0 [shape = 'u32[]', space=smem, size = 0x4, offset = 0x4, fixed_abs, tag = 'smem constant byte address 0x4 - core index']
  #allocation1 [shape = 'u32[144,128]{1,0:T(1,128)}', space=vmem, size = 0x12000, scoped, tag = 'internal scratch']
  %s0 = inlined_call_operand.vmem [shape: f32[16,128], index: 0, kind: input, shape index: {}]
  %s1 = inlined_call_operand.hbm [shape: f32[16,128], index: 1, kind: input, shape index: {}]
  %s2 = inlined_call_operand.vmem [shape: f32[16,1], index: 2, kind: input, shape index: {}]
  %s3 = inlined_call_operand.hbm [shape: f32[1,8,128], index: 3, kind: output, shape index: {}]
  %s4 = sld [smem:[#allocation0]]
  $region30: #{tpu_custom_call.1} parent=0
    _
  %s6 = ssub.s32 1, %s4
  %s7 = scalar_select 0, %s6, %s4
  $region1: #{tpu_custom_call.1} parent=0
    #allocation2 [shape = 'u8[8192]{0}', space=vmem, size = 0x2000, scoped, tag = 'input window, operand 1, single buffered']
    #allocation3 [shape = 's32[1]{0}', space=sflag, size = 0x4, scoped, tag = 'scoped memory for tpu_custom_call.1']
    #allocation4 [shape = 's32[1]{0}', space=sflag, size = 0x4, scoped, tag = 'scoped memory for tpu_custom_call.1']
    #allocation5 [shape = 'u8[4096]{0}', space=vmem, size = 0x1000, scoped, tag = 'output window, operand 0, single buffered']
    %8 = vsyncpa [#allocation3], 0
    %9 = vsyncpa [#allocation4], 0
    // Predicated region
    $region2: #{tpu_custom_call.1} parent=1 // pred_check
      _
    $region3: #{tpu_custom_call.1} parent=1 // pred_check_branch
      %11 = sbr.rel (0) target = $region5
    $region4: #{tpu_custom_call.1} parent=1 // pred_region
      %s12 = sadd.s32 0, 0
      %p13 = scmp.lt.s32.totalorder %s12, 0
      %s14 = scalar_select %p13, %s12, 0
      %s15 = smul.u32 2, %s14
      %p16 = scmp.lt.s32.totalorder %s15, 1
      %s17 = scalar_select %p16, %s15, 1
      %s18 = smul.addr %s17, 8
      %s19 = scalar_lea.vmem %s0, %s18
      %s20 = sadd.s32 0, 0
      %p21 = scmp.lt.s32.totalorder %s20, 0
      %s22 = scalar_select %p21, %s20, 0
      %s23 = smul.u32 2, %s22
    $region5: #{tpu_custom_call.1} parent=1 // pred_fallthru
      _
    // Predicated region
    $region6: #{tpu_custom_call.1} parent=1 // pred_check
      _
    $region7: #{tpu_custom_call.1} parent=1 // pred_check_branch
      %25 = sbr.rel (0) target = $region9
    $region8: #{tpu_custom_call.1} parent=1 // pred_region
      %s26 = sadd.s32 0, 0
      %p27 = scmp.lt.s32.totalorder %s26, 0
      %s28 = scalar_select %p27, %s26, 0
      %s29 = smul.u32 2, %s28
      %s31 = ssub.s32 256, 256
      %32 = vsyncadd [#allocation3], %s31
      %s33 = smul.addr %s29, 128
      %s34 = scalar_lea.hbm %s1, %s33
      %s35 = sshll.u32 [#allocation2], 4
      %s36 = int_to_ptr.vmem [resolvable:$true] %s35
      %41 = dma.hbm_to_vmem [thread:$0]  %s34, 256, %s36, [#allocation3], 128, 128, 8
    $region9: #{tpu_custom_call.1} parent=1 // pred_fallthru
      _
    // Predicated region
    $region10: #{tpu_custom_call.1} parent=1 // pred_check
      _
    $region11: #{tpu_custom_call.1} parent=1 // pred_check_branch
      %43 = sbr.rel (0) target = $region13
    $region12: #{tpu_custom_call.1} parent=1 // pred_region
      %s44 = sadd.s32 0, 0
      %p45 = scmp.lt.s32.totalorder %s44, 0
      %s46 = scalar_select %p45, %s44, 0
      %s47 = smul.u32 2, %s46
      %p48 = scmp.lt.s32.totalorder %s47, 1
      %s49 = scalar_select %p48, %s47, 1
      %s50 = smul.addr %s49, 8
      %s51 = scalar_lea.vmem %s2, %s50
      %s52 = sadd.s32 0, 0
      %p53 = scmp.lt.s32.totalorder %s52, 0
      %s54 = scalar_select %p53, %s52, 0
      %s55 = smul.u32 2, %s54
    $region13: #{tpu_custom_call.1} parent=1 // pred_fallthru
      _
    // Predicated region
    $region14: #{tpu_custom_call.1} parent=1 // pred_check
      _
    $region15: #{tpu_custom_call.1} parent=1 // pred_check_branch
      %57 = sbr.rel (0) target = $region17
    $region16: #{tpu_custom_call.1} parent=1 // pred_region
      %58 = dma.done [#allocation3], 256
    $region17: #{tpu_custom_call.1} parent=1 // pred_fallthru
      _
    %s59 = sadd.s32 0, 0
    %p60 = scmp.lt.s32.totalorder %s59, 0
    %s61 = scalar_select %p60, %s59, 0
    %s62 = smul.u32 2, %s61
    %p63 = scmp.lt.s32.totalorder %s62, 1
    %s64 = scalar_select %p63, %s62, 1
    %s65 = smul.addr %s64, 8
    %s66 = scalar_lea.vmem %s0, %s65
    %s67 = sadd.s32 0, 0
    %p68 = scmp.lt.s32.totalorder %s67, 0
    %s69 = scalar_select %p68, %s67, 0
    %s70 = smul.u32 2, %s69
    %p71 = scmp.lt.s32.totalorder %s70, 1
    %s72 = scalar_select %p71, %s70, 1
    %s73 = smul.addr %s72, 8
    %s74 = scalar_lea.vmem %s2, %s73
    %s75 = sadd.s32 0, 0
    %p76 = scmp.lt.s32.totalorder %s75, 0
    %s77 = scalar_select %p76, %s75, 0
    %s78 = smul.u32 2, %s77
    %p79 = scmp.lt.s32.totalorder %s78, 1
    %s80 = scalar_select %p79, %s78, 1
    %s81 = smul.addr %s80, 8
    %s82 = scalar_lea.vmem %s0, %s81
    %s83 = sadd.s32 0, 0
    %p84 = scmp.lt.s32.totalorder %s83, 0
    %s85 = scalar_select %p84, %s83, 0
    %s86 = smul.u32 2, %s85
    %s87 = sadd.s32 0, 0
    %p88 = scmp.lt.s32.totalorder %s87, 0
    %s89 = scalar_select %p88, %s87, 0
    %s90 = smul.u32 2, %s89
    %s91 = sadd.s32 0, 0
    %p92 = scmp.lt.s32.totalorder %s91, 0
    %s93 = scalar_select %p92, %s91, 0
    %s94 = smul.u32 2, %s93
    %p95 = scmp.lt.s32.totalorder %s94, 1
    %s96 = scalar_select %p95, %s94, 1
    %s97 = smul.addr %s96, 8
    %s98 = scalar_lea.vmem %s2, %s97
    %s99 = sadd.s32 0, 0
    %p100 = scmp.lt.s32.totalorder %s99, 0
    %s101 = scalar_select %p100, %s99, 0
    %s102 = smul.u32 2, %s101
    %p103 = scmp.eq.s32.totalorder 0, 0
    // Predicated region
    $region18: #{tpu_custom_call.1} parent=1 // pred_check
      %p104 = pneg %p103
    $region19: #{tpu_custom_call.1} parent=1 // pred_check_branch
      %106 = sbr.rel (%p104) target = $region21
    $region20: #{tpu_custom_call.1} parent=1 // pred_region
      %107 = vst [vmem:[#allocation5] sm:$0xff] 0.0
    $region21: #{tpu_custom_call.1} parent=1 // pred_fallthru
      _
    %v108 = vld [vmem:[%s82] sm:$0xff]
    %v109 = vld [vmem:[%s82 + $0x8] sm:$0xff]
    %v110 = vld [vmem:[#allocation2] sm:$0xff]
    %v111 = vld [vmem:[#allocation2 + $0x8] sm:$0xff]
    %v112 = vsub.f32 %v108, %v110
    %v113 = vsub.f32 %v109, %v111
    %v114 = vand.u32 2147483647, %v112
    %v115 = vand.u32 2147483647, %v113
    %v116 = vld [vmem:[%s98] sm:$0xff]
    %v117 = vld [vmem:[%s98 + $0x8] sm:$0xff]
    %119 = vset.pattern.permute.xlu0 0
    %120 = vperm.xlu0 %119, %v116
    %v121 = vpop.permute.xlu0 %120
    %124 = vset.pattern.permute.xlu0 0
    %125 = vperm.xlu0 %124, %v117
    %v126 = vpop.permute.xlu0 %125
    %v128 = vmul.f32 %v121, %v114
    %v129 = vmul.f32 %v126, %v115
    %v130 = vld [vmem:[#allocation5] sm:$0xff]
    %v131 = vadd.f32 %v128, %v129
    %v132 = vadd.f32 %v130, %v131
    %133 = vst [vmem:[#allocation5] sm:$0xff] %v132
    // Predicated region
    $region22: #{tpu_custom_call.1} parent=1 // pred_check
      _
    $region23: #{tpu_custom_call.1} parent=1 // pred_check_branch
      %135 = sbr.rel (0) target = $region25
    $region24: #{tpu_custom_call.1} parent=1 // pred_region
      %s137 = ssub.s32 128, 128
      %138 = vsyncadd [#allocation4], %s137
      %s140 = sshll.u32 [#allocation5], 4
      %s141 = int_to_ptr.vmem [resolvable:$true] %s140
      %143 = dma.vmem_to_hbm [thread:$0]  %s141, 128, %s3, [#allocation4]
    $region25: #{tpu_custom_call.1} parent=1 // pred_fallthru
      _
    // Predicated region
    $region26: #{tpu_custom_call.1} parent=1 // pred_check
      _
    $region27: #{tpu_custom_call.1} parent=1 // pred_check_branch
      %145 = sbr.rel (0) target = $region29
    $region28: #{tpu_custom_call.1} parent=1 // pred_region
      %146 = dma.done [#allocation4], 128
    $region29: #{tpu_custom_call.1} parent=1 // pred_fallthru
      _
    %147 = vsyncpa [#allocation3], 1
    %148 = vsyncpa [#allocation4], 1

</llo_original>
